<compile_context>
chip_gen: v7x
topology: tpu7x:2x2x1
jax: 0.10.0
libtpu: 0.0.40
codegen_flags: <defaults>
</compile_context>

<pallas_src>
from functools import partial

import jax
import jax.numpy as jnp
from jax.experimental import pallas as pl
from jax.experimental.pallas import tpu as pltpu


def _softplus(x):
    # Numerically stable softplus (matches F.softplus with beta=1).
    return jnp.maximum(x, 0.0) + jnp.log1p(jnp.exp(-jnp.abs(x)))


def _round_up(x, m):
    return ((x + m - 1) // m) * m


def convex_q_kernel(x_ref, w_ref, b_ref, head_ref, b2_ref, out_ref, *, hidden_size):
    """Feature-major body.

    x_ref    : [S+E, TB]  streamed batch block (features on sublanes, batch on lanes)
    w_ref    : [2H+1, S+E] fused transposed weight:
                 rows [0,H)   = Ws^T        (s cols) |   0              (a cols)
                 rows [H,2H)  = Wu1^T       (s cols) | softplus(Wz1)^T  (a cols)
                 row  2H      = 0           (s cols) | Wa^T             (a cols)
    b_ref    : [2H+1, 1]  folded biases  [Ws_b | Wz1_b+Wu1_b | Wa_b]^T
    head_ref : [2H, 1]    head column    [Wu2 | softplus(Wz2)]^T
    b2_ref   : [1, 1]     folded head bias (Wu2_b + Wz2_b)
    out_ref  : [1, TB]    -z2 for this batch block (lane-dense store)
    """
    h2 = 2 * hidden_size

    # One fused MXU pass: [2H+1, S+E] @ [S+E, TB] -> [2H+1, TB] (+ folded biases).
    t = jnp.dot(w_ref[...], x_ref[...], preferred_element_type=jnp.float32) + b_ref[...]

    # Rows [0,H) are u1-pre, rows [H,2H) are z1-pre; both get relu'd.
    uz = jnp.maximum(t[:h2, :], 0.0)                                   # [2H, TB] f32

    # Head: VPU multiply by the [2H,1] head column + one sublane reduce,
    # plus the a.Wa row (already computed by the fused matmul) and the folded bias.
    z2 = ((uz * head_ref[...]).sum(axis=0, keepdims=True)
          + t[h2:, :] + b2_ref[...])                                   # [1, TB] f32

    # forward returns minus_Q(s, a) * -1
    out_ref[...] = -z2


def convex_q_forward(s, a, params, *, use_bf16=True, block_b=8192):
    """Returns (-minus_Q(s, a), a), matching ConvexQNetwork.forward when a is given."""
    B, S = s.shape
    E = a.shape[1]
    H = params["Ws_w"].shape[1]

    # ---- loop-invariant precompute (done once, outside the batch loop) -------------
    wz1_pos = _softplus(params["Wz1_w"])                                # [E, H]
    wz2_pos = _softplus(params["Wz2_w"])                                # [H, 1]

    # Fused, transposed block weight [2H+1, S+E] (u1 | z1 | a-head columns).
    col_u1 = jnp.concatenate([params["Ws_w"], jnp.zeros((E, H), jnp.float32)], axis=0)
    col_z1 = jnp.concatenate([params["Wu1_w"], wz1_pos], axis=0)
    col_a = jnp.concatenate([jnp.zeros((S, 1), jnp.float32), params["Wa_w"]], axis=0)
    w_t = jnp.concatenate([col_u1, col_z1, col_a], axis=1).T            # [2H+1, S+E]

    # Folded biases (feature-major column vectors).
    b_cat = jnp.concatenate([params["Ws_b"],
                             params["Wz1_b"] + params["Wu1_b"],
                             params["Wa_b"]], axis=1).T                 # [2H+1, 1]
    head_col = jnp.concatenate([params["Wu2_w"], wz2_pos], axis=0)      # [2H, 1]
    b2 = params["Wu2_b"] + params["Wz2_b"]                              # [1, 1]

    # bf16 for the streamed data + fused weight (halves HBM bytes); f32 accumulation
    # and f32 elementwise inside the kernel (also keeps v5e happy -- no bf16 VPU).
    compute_dtype = jnp.bfloat16 if use_bf16 else jnp.float32
    w_t = w_t.astype(compute_dtype)

    # Single fused streamed operand, feature-major: x^T = [S+E, Bp] (batch on lanes).
    x = jnp.concatenate([s, a], axis=1).astype(compute_dtype)           # [B, S+E]

    # ---- batch tiling (batch is the lane axis -> TB must be a multiple of 128) -----
    Bp128 = _round_up(B, 128)
    TB = min(_round_up(block_b, 128), Bp128)
    # v7x: keep >=2 grid steps when the batch allows it so both TensorCores get work.
    if TB >= Bp128 and Bp128 >= 256:
        TB = _round_up(Bp128 // 2, 128)
    Bp = _round_up(B, TB)
    if Bp != B:
        x = jnp.pad(x, ((0, Bp - B), (0, 0)))
    x_t = x.T                                                           # [S+E, Bp]
    grid = (Bp // TB,)

    def const(shape):  # whole-array, grid-invariant block
        return pl.BlockSpec(shape, lambda i: (0, 0))

    itemsize = jnp.dtype(compute_dtype).itemsize
    cost = pl.CostEstimate(
        flops=2 * Bp * (S + E) * (2 * H + 1) + 3 * Bp * 2 * H,
        transcendentals=0,
        bytes_accessed=(Bp * (S + E) * itemsize          # streamed x^T (lane-dense)
                        + 8 * Bp * 4                     # output row (sublane-padded)
                        + w_t.size * itemsize
                        + (b_cat.size + head_col.size + b2.size) * 4),
    )

    neg_q = pl.pallas_call(
        partial(convex_q_kernel, hidden_size=H),
        out_shape=jax.ShapeDtypeStruct((1, Bp), jnp.float32),
        grid=grid,
        in_specs=[
            pl.BlockSpec((S + E, TB), lambda i: (0, i)),   # x^T, streamed over batch
            const((2 * H + 1, S + E)),                     # fused transposed weight
            const((2 * H + 1, 1)),                         # folded biases
            const((2 * H, 1)),                             # head column
            const((1, 1)),                                 # folded head bias
        ],
        out_specs=pl.BlockSpec((1, TB), lambda i: (0, i)), # lane-dense output row
        compiler_params=pltpu.CompilerParams(dimension_semantics=("parallel",)),
        cost_estimate=cost,
    )(x_t, w_t, b_cat, head_col, b2)

    return neg_q[0, :B].reshape(B, 1), a


def init_params(key, state_size, emb_size, hidden_size):
    """Deterministic synthetic parameters with the same shapes as the nn.Linear layers
    (stored transposed: [in, out]); biases kept 2D [1, out] for TPU friendliness."""
    def lin(k, fan_in, fan_out):
        kw, kb = jax.random.split(k)
        scale = 1.0 / jnp.sqrt(jnp.asarray(fan_in, jnp.float32))
        w = jax.random.normal(kw, (fan_in, fan_out), jnp.float32) * scale
        b = jax.random.normal(kb, (1, fan_out), jnp.float32) * 0.01
        return w, b

    k = jax.random.split(key, 6)
    p = {}
    p["Ws_w"], p["Ws_b"] = lin(k[0], state_size, hidden_size)     # Ws:   state -> hidden
    p["Wu1_w"], p["Wu1_b"] = lin(k[1], state_size, hidden_size)   # Wu_1: state -> hidden
    p["Wz1_w"], p["Wz1_b"] = lin(k[2], emb_size, hidden_size)     # Wz_1: emb   -> hidden (raw)
    p["Wz2_w"], p["Wz2_b"] = lin(k[3], hidden_size, 1)            # Wz_2: hidden -> 1     (raw)
    p["Wu2_w"], p["Wu2_b"] = lin(k[4], hidden_size, 1)            # Wu_2: hidden -> 1
    p["Wa_w"], p["Wa_b"] = lin(k[5], emb_size, 1)                 # Wa:   emb   -> 1
    return p


def _reference_forward(s, a, p):
    """Pure-JAX reference of ConvexQNetwork.forward (a given)."""
    u1 = jax.nn.relu(s @ p["Ws_w"] + p["Ws_b"])
    z1 = jax.nn.relu(a @ _softplus(p["Wz1_w"]) + p["Wz1_b"] + s @ p["Wu1_w"] + p["Wu1_b"])
    z2 = (u1 @ p["Wu2_w"] + p["Wu2_b"]
          + z1 @ _softplus(p["Wz2_w"]) + p["Wz2_b"]
          + a @ p["Wa_w"] + p["Wa_b"])
    return -z2


if __name__ == "__main__":
    STATE, EMB, HIDDEN = 16, 8, 32

    key = jax.random.PRNGKey(0)
    k_param, k_s, k_a, k_s2, k_a2 = jax.random.split(key, 5)
    params = init_params(k_param, STATE, EMB, HIDDEN)

    # --- small batch (B=10, not a multiple of 128 -> exercises tail padding) --------
    B = 10
    s = jax.random.normal(k_s, (B, STATE), jnp.float32)
    a = jax.random.normal(k_a, (B, EMB), jnp.float32)
    ref = _reference_forward(s, a, params)

    # f32 path: tight check against the reference.
    neg_q, a_out = convex_q_forward(s, a, params, use_bf16=False)
    neg_q = jax.block_until_ready(neg_q)
    assert neg_q.shape == (B, 1)
    assert jnp.allclose(neg_q, ref, atol=1e-5, rtol=1e-5), (neg_q, ref)

    # bf16-streaming path (the default): loose check.
    neg_q_bf16, _ = convex_q_forward(s, a, params, use_bf16=True)
    neg_q_bf16 = jax.block_until_ready(neg_q_bf16)
    assert neg_q_bf16.shape == (B, 1)
    assert jnp.allclose(neg_q_bf16, ref, atol=1e-1, rtol=1e-1), (neg_q_bf16, ref)

    # --- larger batch that forces a multi-step grid (>=2 tiles, v7x megacore path) --
    B2 = 300
    s2 = jax.random.normal(k_s2, (B2, STATE), jnp.float32)
    a2 = jax.random.normal(k_a2, (B2, EMB), jnp.float32)
    ref2 = _reference_forward(s2, a2, params)
    neg_q2, _ = convex_q_forward(s2, a2, params, use_bf16=False)
    neg_q2 = jax.block_until_ready(neg_q2)
    assert neg_q2.shape == (B2, 1)
    assert jnp.allclose(neg_q2, ref2, atol=1e-5, rtol=1e-5), (neg_q2, ref2)

    print("KERNEL_OK")
</pallas_src>

<mosaic_0001>
module attributes {stable_mosaic.version = 11 : i64} {
  func.func @convex_q_kernel(%arg0: i32, %arg1: memref<24x128xf32, #tpu.memory_space<vmem>>, %arg2: memref<65x24xf32, #tpu.memory_space<vmem>>, %arg3: memref<65x1xf32, #tpu.memory_space<vmem>>, %arg4: memref<64x1xf32, #tpu.memory_space<vmem>>, %arg5: memref<1x1xf32, #tpu.memory_space<vmem>>, %arg6: memref<1x128xf32, #tpu.memory_space<vmem>>) attributes {dimension_semantics = [#tpu.dimension_semantics<parallel>], iteration_bounds = array<i64: 1>, scalar_prefetch = 0 : i64, scratch_operands = 0 : i64, tpu.core_type = #tpu.core_type<tc>, window_params = [{transform_indices = @transform_0, window_bounds = array<i64: 24, 128>}, {pipeline_mode = #tpu.pipeline_mode<synchronous>, transform_indices = @transform_1, window_bounds = array<i64: 65, 24>}, {pipeline_mode = #tpu.pipeline_mode<synchronous>, transform_indices = @transform_2, window_bounds = array<i64: 65, 1>}, {pipeline_mode = #tpu.pipeline_mode<synchronous>, transform_indices = @transform_3, window_bounds = array<i64: 64, 1>}, {pipeline_mode = #tpu.pipeline_mode<synchronous>, transform_indices = @transform_4, window_bounds = array<i64: 1, 1>}, {transform_indices = @transform_5, window_bounds = array<i64: 1, 128>}]} {
    %c0 = arith.constant 0 : index
    %c0_0 = arith.constant 0 : index
    %0 = vector.load %arg2[%c0, %c0_0] : memref<65x24xf32, #tpu.memory_space<vmem>>, vector<65x24xf32>
    %c0_1 = arith.constant 0 : index
    %c0_2 = arith.constant 0 : index
    %1 = vector.load %arg1[%c0_1, %c0_2] : memref<24x128xf32, #tpu.memory_space<vmem>>, vector<24x128xf32>
    %cst = arith.constant dense<0.000000e+00> : vector<65x128xf32>
    %2 = tpu.matmul %0, %1, %cst {dimension_numbers = #tpu.dot_dimension_numbers<[1], [0], [0], [1], [0, 0, 1, 1], [], []>} : vector<65x24xf32>, vector<24x128xf32>, vector<65x128xf32> -> vector<65x128xf32>
    %c0_3 = arith.constant 0 : index
    %c0_4 = arith.constant 0 : index
    %3 = vector.load %arg3[%c0_3, %c0_4] : memref<65x1xf32, #tpu.memory_space<vmem>>, vector<65x1xf32>
    %4 = vector.broadcast %3 : vector<65x1xf32> to vector<65x128xf32>
    %5 = arith.addf %2, %4 : vector<65x128xf32>
    %6 = vector.extract_strided_slice %5 {offsets = [0, 0], sizes = [64, 128], strides = [1, 1]} : vector<65x128xf32> to vector<64x128xf32>
    %cst_5 = arith.constant 0.000000e+00 : f32
    %7 = vector.broadcast %cst_5 : f32 to vector<64x128xf32>
    %8 = arith.maximumf %6, %7 : vector<64x128xf32>
    %c0_6 = arith.constant 0 : index
    %c0_7 = arith.constant 0 : index
    %9 = vector.load %arg4[%c0_6, %c0_7] : memref<64x1xf32, #tpu.memory_space<vmem>>, vector<64x1xf32>
    %10 = vector.broadcast %9 : vector<64x1xf32> to vector<64x128xf32>
    %11 = arith.mulf %8, %10 : vector<64x128xf32>
    %cst_8 = arith.constant dense<0.000000e+00> : vector<128xf32>
    %12 = vector.multi_reduction <add>, %11, %cst_8 [0] : vector<64x128xf32> to vector<128xf32>
    %13 = vector.shape_cast %12 : vector<128xf32> to vector<1x128xf32>
    %14 = vector.extract_strided_slice %5 {offsets = [64, 0], sizes = [1, 128], strides = [1, 1]} : vector<65x128xf32> to vector<1x128xf32>
    %15 = arith.addf %13, %14 : vector<1x128xf32>
    %c0_9 = arith.constant 0 : index
    %c0_10 = arith.constant 0 : index
    %16 = vector.load %arg5[%c0_9, %c0_10] : memref<1x1xf32, #tpu.memory_space<vmem>>, vector<1x1xf32>
    %17 = vector.broadcast %16 : vector<1x1xf32> to vector<1x128xf32>
    %18 = arith.addf %15, %17 : vector<1x128xf32>
    %cst_11 = arith.constant 0.000000e+00 : f32
    %19 = vector.broadcast %cst_11 : f32 to vector<1x128xf32>
    %20 = arith.subf %19, %18 : vector<1x128xf32>
    %c0_12 = arith.constant 0 : index
    %c0_13 = arith.constant 0 : index
    %21 = vector.load %arg6[%c0_12, %c0_13] : memref<1x128xf32, #tpu.memory_space<vmem>>, vector<1x128xf32>
    tpu.vector_store %arg6[%c0_12, %c0_13], %20 {strides = array<i32>} : memref<1x128xf32, #tpu.memory_space<vmem>>, vector<1x128xf32>,
    return
  }
  func.func @transform_0(%arg0: i32) -> (i32, i32) {
    %c0_i32 = arith.constant 0 : i32
    %c0_i32_0 = arith.constant 0 : i32
    return %c0_i32, %arg0 : i32, i32
  }
  func.func @transform_1(%arg0: i32) -> (i32, i32) {
    %c0_i32 = arith.constant 0 : i32
    %c0_i32_0 = arith.constant 0 : i32
    %c0_i32_1 = arith.constant 0 : i32
    return %c0_i32, %c0_i32_0 : i32, i32
  }
  func.func @transform_2(%arg0: i32) -> (i32, i32) {
    %c0_i32 = arith.constant 0 : i32
    %c0_i32_0 = arith.constant 0 : i32
    %c0_i32_1 = arith.constant 0 : i32
    return %c0_i32, %c0_i32_0 : i32, i32
  }
  func.func @transform_3(%arg0: i32) -> (i32, i32) {
    %c0_i32 = arith.constant 0 : i32
    %c0_i32_0 = arith.constant 0 : i32
    %c0_i32_1 = arith.constant 0 : i32
    return %c0_i32, %c0_i32_0 : i32, i32
  }
  func.func @transform_4(%arg0: i32) -> (i32, i32) {
    %c0_i32 = arith.constant 0 : i32
    %c0_i32_0 = arith.constant 0 : i32
    %c0_i32_1 = arith.constant 0 : i32
    return %c0_i32, %c0_i32_0 : i32, i32
  }
  func.func @transform_5(%arg0: i32) -> (i32, i32) {
    %c0_i32 = arith.constant 0 : i32
    %c0_i32_0 = arith.constant 0 : i32
    return %c0_i32, %arg0 : i32, i32
  }
}

</mosaic_0001>

<llo_original>
// kernel: tpu_custom_call.1
$region0: #{tpu_custom_call.1}
  #allocation0 [shape = 'u32[]', space=smem, size = 0x4, offset = 0x4, fixed_abs, tag = 'smem constant byte address 0x4 - core index']
  #allocation1 [shape = 'u32[144,128]{1,0:T(1,128)}', space=vmem, size = 0x12000, scoped, tag = 'internal scratch']
  #allocation2 [shape = 'f32[1,1]{1,0:T(1,128)S(1)}', space=vmem, size = 0x200, scoped, tag = 'scoped memory for tpu_custom_call.1']
  %s0 = inlined_call_operand.vmem [shape: f32[24,128], index: 0, kind: input, shape index: {}]
  %s1 = inlined_call_operand.vmem [shape: f32[65,24], index: 1, kind: input, shape index: {}]
  %s2 = inlined_call_operand.vmem [shape: f32[65,1], index: 2, kind: input, shape index: {}]
  %s3 = inlined_call_operand.vmem [shape: f32[64,1], index: 3, kind: input, shape index: {}]
  %s4 = inlined_call_operand.<no memory space> [shape: f32[1,1], index: 4, kind: input, shape index: {}]
  %s5 = inlined_call_operand.hbm [shape: f32[1,128], index: 5, kind: output, shape index: {}]
  %s6 = sld [smem:[#allocation0]]
  $region30: #{tpu_custom_call.1} parent=0
    _
  %s8 = ssub.s32 1, %s6
  %s9 = scalar_select 0, %s8, %s6
  %v10 = vstv %s4
  %11 = vst [vmem:[#allocation2] sm:$0x1] %v10
  $region1: #{tpu_custom_call.1} parent=0
    #allocation3 [shape = 'u8[512]{0}', space=vmem, size = 0x400, scoped, tag = 'output window, operand 0, single buffered']
    #allocation4 [shape = 's32[1]{0}', space=sflag, size = 0x4, scoped, tag = 'scoped memory for tpu_custom_call.1']
    %12 = vsyncpa [#allocation4], 0
    // Predicated region
    $region2: #{tpu_custom_call.1} parent=1 // pred_check
      _
    $region3: #{tpu_custom_call.1} parent=1 // pred_check_branch
      %14 = sbr.rel (0) target = $region5
    $region4: #{tpu_custom_call.1} parent=1 // pred_region
      _
    $region5: #{tpu_custom_call.1} parent=1 // pred_fallthru
      _
    // Predicated region
    $region6: #{tpu_custom_call.1} parent=1 // pred_check
      _
    $region7: #{tpu_custom_call.1} parent=1 // pred_check_branch
      %16 = sbr.rel (0) target = $region9
    $region8: #{tpu_custom_call.1} parent=1 // pred_region
      _
    $region9: #{tpu_custom_call.1} parent=1 // pred_fallthru
      _
    // Predicated region
    $region10: #{tpu_custom_call.1} parent=1 // pred_check
      _
    $region11: #{tpu_custom_call.1} parent=1 // pred_check_branch
      %18 = sbr.rel (0) target = $region13
    $region12: #{tpu_custom_call.1} parent=1 // pred_region
      _
    $region13: #{tpu_custom_call.1} parent=1 // pred_fallthru
      _
    // Predicated region
    $region14: #{tpu_custom_call.1} parent=1 // pred_check
      _
    $region15: #{tpu_custom_call.1} parent=1 // pred_check_branch
      %20 = sbr.rel (0) target = $region17
    $region16: #{tpu_custom_call.1} parent=1 // pred_region
      _
    $region17: #{tpu_custom_call.1} parent=1 // pred_fallthru
      _
    // Predicated region
    $region18: #{tpu_custom_call.1} parent=1 // pred_check
      _
    $region19: #{tpu_custom_call.1} parent=1 // pred_check_branch
      %22 = sbr.rel (0) target = $region21
    $region20: #{tpu_custom_call.1} parent=1 // pred_region
      _
    $region21: #{tpu_custom_call.1} parent=1 // pred_fallthru
      _
    %v23 = vld [vmem:[%s1] sm:$0xff]
    %v24 = vld [vmem:[%s1 + $0x8] sm:$0xff]
    %v25 = vld [vmem:[%s1 + $0x10] sm:$0xff]
    %v26 = vld [vmem:[%s1 + $0x18] sm:$0xff]
    %v27 = vld [vmem:[%s1 + $0x20] sm:$0xff]
    %v28 = vld [vmem:[%s1 + $0x28] sm:$0xff]
    %v29 = vld [vmem:[%s1 + $0x30] sm:$0xff]
    %v30 = vld [vmem:[%s1 + $0x38] sm:$0xff]
    %v31 = vld [vmem:[%s1 + $0x40] sm:$0x1]
    %v32 = vld [vmem:[%s0] sm:$0xff]
    %v33 = vld [vmem:[%s0 + $0x8] sm:$0xff]
    %v34 = vld [vmem:[%s0 + $0x10] sm:$0xff]
    %v35 = vld [vmem:[%s2] sm:$0xff]
    %v36 = vld [vmem:[%s2 + $0x8] sm:$0xff]
    %v37 = vld [vmem:[%s2 + $0x10] sm:$0xff]
    %v38 = vld [vmem:[%s2 + $0x18] sm:$0xff]
    %v39 = vld [vmem:[%s2 + $0x20] sm:$0xff]
    %v40 = vld [vmem:[%s2 + $0x28] sm:$0xff]
    %v41 = vld [vmem:[%s2 + $0x30] sm:$0xff]
    %v42 = vld [vmem:[%s2 + $0x38] sm:$0xff]
    %v43 = vld [vmem:[%s2 + $0x40] sm:$0x1]
    %45 = vset.pattern.permute.xlu0 0
    %46 = vperm.xlu0 %45, %v35
    %v47 = vpop.permute.xlu0 %46
    %50 = vset.pattern.permute.xlu0 0
    %51 = vperm.xlu0 %50, %v36
    %v52 = vpop.permute.xlu0 %51
    %55 = vset.pattern.permute.xlu0 0
    %56 = vperm.xlu0 %55, %v37
    %v57 = vpop.permute.xlu0 %56
    %60 = vset.pattern.permute.xlu0 0
    %61 = vperm.xlu0 %60, %v38
    %v62 = vpop.permute.xlu0 %61
    %65 = vset.pattern.permute.xlu0 0
    %66 = vperm.xlu0 %65, %v39
    %v67 = vpop.permute.xlu0 %66
    %70 = vset.pattern.permute.xlu0 0
    %71 = vperm.xlu0 %70, %v40
    %v72 = vpop.permute.xlu0 %71
    %75 = vset.pattern.permute.xlu0 0
    %76 = vperm.xlu0 %75, %v41
    %v77 = vpop.permute.xlu0 %76
    %80 = vset.pattern.permute.xlu0 0
    %81 = vperm.xlu0 %80, %v42
    %v82 = vpop.permute.xlu0 %81
    %85 = vset.pattern.permute.xlu0 0
    %86 = vperm.xlu0 %85, %v43
    %v87 = vpop.permute.xlu0 %86
    %vm89 = vcmask 195584
    %v91 = vsel %vm89, %v23, 0
    %v94 = vsel %vm89, %v24, 0
    %v97 = vsel %vm89, %v25, 0
    %v100 = vsel %vm89, %v26, 0
    %v103 = vsel %vm89, %v27, 0
    %v106 = vsel %vm89, %v28, 0
    %v109 = vsel %vm89, %v29, 0
    %v112 = vsel %vm89, %v30, 0
    %v115 = vsel %vm89, %v31, 0
    %117 = vmatprep.subr.mxu0 0.0
    %118 = vmatpush1.msra.mxu0 %v32
    %119 = vmatprep.subr.mxu0 0.0
    %120 = vmatpush1.msra.mxu0 %v33
    %121 = vmatprep.subr.mxu0 0.0
    %122 = vmatpush1.msra.mxu0 %v34
    %123 = vmatprep.subr.mxu0 0.0
    %124 = vmatpush1.msra.mxu0 0.0
    %125 = vmatprep.subr.mxu0 0.0
    %126 = vmatpush1.msra.mxu0 0.0
    %127 = vmatprep.subr.mxu0 0.0
    %128 = vmatpush1.msra.mxu0 0.0
    %129 = vmatprep.subr.mxu0 0.0
    %130 = vmatpush1.msra.mxu0 0.0
    %131 = vmatprep.subr.mxu0 0.0
    %132 = vmatpush1.msra.mxu0 0.0
    %133 = vmatprep.subr.mxu0 0.0
    %134 = vmatpush1.msra.mxu0 0.0
    %135 = vmatprep.subr.mxu0 0.0
    %136 = vmatpush1.msra.mxu0 0.0
    %137 = vmatprep.subr.mxu0 0.0
    %138 = vmatpush1.msra.mxu0 0.0
    %139 = vmatprep.subr.mxu0 0.0
    %140 = vmatpush1.msra.mxu0 0.0
    %141 = vmatprep.subr.mxu0 0.0
    %142 = vmatpush1.msra.mxu0 0.0
    %143 = vmatprep.subr.mxu0 0.0
    %144 = vmatpush1.msra.mxu0 0.0
    %145 = vmatprep.subr.mxu0 0.0
    %146 = vmatpush1.msra.mxu0 0.0
    %147 = vmatprep.subr.mxu0 0.0
    %148 = vmatpush1.msra.mxu0 0.0
    %149 = vmatprep.subr.mxu0 0.0
    %150 = vmatpush1.msra.mxu0 0.0
    %151 = vmatprep.subr.mxu0 0.0
    %152 = vmatpush1.msra.mxu0 0.0
    %153 = vmatprep.subr.mxu0 0.0
    %154 = vmatpush1.msra.mxu0 0.0
    %155 = vmatprep.subr.mxu0 0.0
    %156 = vmatpush1.msra.mxu0 0.0
    %157 = vmatprep.subr.mxu0 0.0
    %158 = vmatpush1.msra.mxu0 0.0
    %159 = vmatprep.subr.mxu0 0.0
    %160 = vmatpush1.msra.mxu0 0.0
    %161 = vmatprep.subr.mxu0 0.0
    %162 = vmatpush1.msra.mxu0 0.0
    %163 = vmatprep.subr.mxu0 0.0
    %164 = vmatpush1.msra.mxu0 0.0
    %165 = vmatprep.subr.mxu0 0.0
    %166 = vmatpush1.msra.mxu0 0.0
    %167 = vmatprep.subr.mxu0 0.0
    %168 = vmatpush1.msra.mxu0 0.0
    %169 = vmatprep.subr.mxu0 0.0
    %170 = vmatpush1.msra.mxu0 0.0
    %171 = vmatprep.subr.mxu0 0.0
    %172 = vmatpush1.msra.mxu0 0.0
    %173 = vmatprep.subr.mxu0 0.0
    %174 = vmatpush1.msra.mxu0 0.0
    %175 = vmatprep.subr.mxu0 0.0
    %176 = vmatpush1.msra.mxu0 0.0
    %177 = vmatprep.subr.mxu0 0.0
    %178 = vmatpush1.msra.mxu0 0.0
    %179 = vmatprep.subr.mxu0 0.0
    %180 = vmatpush1.msra.mxu0 0.0
    %181 = vmatprep.mubr.f32.mxu0 0.0
    %182 = vmatmul.mubr.f32.gmra.mrb[0].mxu0 %v91
    %v183 = vpop.f32.mrb[0].mxu0
    %v184 = vadd.f32 %v47, %v183
    %v185 = vpop.f32.mrb[0].mxu0
    %186 = vmatprep.mubr.f32.mxu0 0.0
    %187 = vmatmul.mubr.f32.gmra.mrb[0].mxu0 %v94
    %v188 = vpop.f32.mrb[0].mxu0
    %v189 = vadd.f32 %v52, %v188
    %v190 = vpop.f32.mrb[0].mxu0
    %191 = vmatprep.mubr.f32.mxu0 0.0
    %192 = vmatmul.mubr.f32.gmra.mrb[0].mxu0 %v97
    %v193 = vpop.f32.mrb[0].mxu0
    %v194 = vadd.f32 %v57, %v193
    %v195 = vpop.f32.mrb[0].mxu0
    %196 = vmatprep.mubr.f32.mxu0 0.0
    %197 = vmatmul.mubr.f32.gmra.mrb[0].mxu0 %v100
    %v198 = vpop.f32.mrb[0].mxu0
    %v199 = vadd.f32 %v62, %v198
    %v200 = vpop.f32.mrb[0].mxu0
    %201 = vmatprep.mubr.f32.mxu0 0.0
    %202 = vmatmul.mubr.f32.gmra.mrb[0].mxu0 %v103
    %v203 = vpop.f32.mrb[0].mxu0
    %v204 = vadd.f32 %v67, %v203
    %v205 = vpop.f32.mrb[0].mxu0
    %206 = vmatprep.mubr.f32.mxu0 0.0
    %207 = vmatmul.mubr.f32.gmra.mrb[0].mxu0 %v106
    %v208 = vpop.f32.mrb[0].mxu0
    %v209 = vadd.f32 %v72, %v208
    %v210 = vpop.f32.mrb[0].mxu0
    %211 = vmatprep.mubr.f32.mxu0 0.0
    %212 = vmatmul.mubr.f32.gmra.mrb[0].mxu0 %v109
    %v213 = vpop.f32.mrb[0].mxu0
    %v214 = vadd.f32 %v77, %v213
    %v215 = vpop.f32.mrb[0].mxu0
    %216 = vmatprep.mubr.f32.mxu0 0.0
    %217 = vmatmul.mubr.f32.gmra.mrb[0].mxu0 %v112
    %v218 = vpop.f32.mrb[0].mxu0
    %v219 = vadd.f32 %v82, %v218
    %v220 = vpop.f32.mrb[0].mxu0
    %221 = vmatprep.mubr.f32.mxu0 0.0
    %222 = vmatmul.mubr.f32.gmra.mrb[0].mxu0 %v115
    %v223 = vpop.f32.mrb[0].mxu0
    %v224 = vadd.f32 %v87, %v223
    %v225 = vpop.f32.mrb[0].mxu0
    %226 = vdwg.mxu0
    %v227 = vmax.f32 %v184, 0.0
    %v228 = vmax.f32 %v189, 0.0
    %v229 = vmax.f32 %v194, 0.0
    %v230 = vmax.f32 %v199, 0.0
    %v231 = vmax.f32 %v204, 0.0
    %v232 = vmax.f32 %v209, 0.0
    %v233 = vmax.f32 %v214, 0.0
    %v234 = vmax.f32 %v219, 0.0
    %v235 = vld [vmem:[%s3] sm:$0xff]
    %v236 = vld [vmem:[%s3 + $0x8] sm:$0xff]
    %v237 = vld [vmem:[%s3 + $0x10] sm:$0xff]
    %v238 = vld [vmem:[%s3 + $0x18] sm:$0xff]
    %v239 = vld [vmem:[%s3 + $0x20] sm:$0xff]
    %v240 = vld [vmem:[%s3 + $0x28] sm:$0xff]
    %v241 = vld [vmem:[%s3 + $0x30] sm:$0xff]
    %v242 = vld [vmem:[%s3 + $0x38] sm:$0xff]
    %244 = vset.pattern.permute.xlu0 0
    %245 = vperm.xlu0 %244, %v235
    %v246 = vpop.permute.xlu0 %245
    %249 = vset.pattern.permute.xlu0 0
    %250 = vperm.xlu0 %249, %v236
    %v251 = vpop.permute.xlu0 %250
    %254 = vset.pattern.permute.xlu0 0
    %255 = vperm.xlu0 %254, %v237
    %v256 = vpop.permute.xlu0 %255
    %259 = vset.pattern.permute.xlu0 0
    %260 = vperm.xlu0 %259, %v238
    %v261 = vpop.permute.xlu0 %260
    %264 = vset.pattern.permute.xlu0 0
    %265 = vperm.xlu0 %264, %v239
    %v266 = vpop.permute.xlu0 %265
    %269 = vset.pattern.permute.xlu0 0
    %270 = vperm.xlu0 %269, %v240
    %v271 = vpop.permute.xlu0 %270
    %274 = vset.pattern.permute.xlu0 0
    %275 = vperm.xlu0 %274, %v241
    %v276 = vpop.permute.xlu0 %275
    %279 = vset.pattern.permute.xlu0 0
    %280 = vperm.xlu0 %279, %v242
    %v281 = vpop.permute.xlu0 %280
    %v283 = vmul.f32 %v227, %v246
    %v284 = vmul.f32 %v228, %v251
    %v285 = vmul.f32 %v229, %v256
    %v286 = vmul.f32 %v230, %v261
    %v287 = vmul.f32 %v231, %v266
    %v288 = vmul.f32 %v232, %v271
    %v289 = vmul.f32 %v233, %v276
    %v290 = vmul.f32 %v234, %v281
    %v291 = vadd.f32 %v283, %v284
    %v292 = vadd.f32 %v291, %v285
    %v293 = vadd.f32 %v292, %v286
    %v294 = vadd.f32 %v293, %v287
    %v295 = vadd.f32 %v294, %v288
    %v296 = vadd.f32 %v295, %v289
    %v297 = vadd.f32 %v296, %v290
    %v298 = vrot.slane %v297, 4
    %v299 = vadd.f32 %v297, %v298
    %v300 = vrot.slane %v299, 2
    %v301 = vadd.f32 %v299, %v300
    %v302 = vrot.slane %v301, 1
    %v303 = vadd.f32 %v301, %v302
    %v304 = vadd.f32 %v303, %v224
    %v305 = vld [vmem:[#allocation2] sm:$0x1]
    %307 = vset.pattern.permute.xlu0 0
    %308 = vperm.xlu0 %307, %v305
    %v309 = vpop.permute.xlu0 %308
    %v311 = vlaneseq
    %v312 = vshrl.u32 %v311, 7
    %v313 = vsub.s32 0, %v312
    %v314 = vrot.slane %v309, %v313
    %v315 = vadd.f32 %v304, %v314
    %v316 = vsub.f32 0.0, %v315
    %317 = vst [vmem:[#allocation3] sm:$0x1] %v316
    // Predicated region
    $region22: #{tpu_custom_call.1} parent=1 // pred_check
      _
    $region23: #{tpu_custom_call.1} parent=1 // pred_check_branch
      %319 = sbr.rel (0) target = $region25
    $region24: #{tpu_custom_call.1} parent=1 // pred_region
      %s321 = ssub.s32 16, 16
      %322 = vsyncadd [#allocation4], %s321
      %s324 = sshll.u32 [#allocation3], 4
      %s325 = int_to_ptr.vmem [resolvable:$true] %s324
      %327 = dma.vmem_to_hbm [thread:$0]  %s325, 16, %s5, [#allocation4]
    $region25: #{tpu_custom_call.1} parent=1 // pred_fallthru
      _
    // Predicated region
    $region26: #{tpu_custom_call.1} parent=1 // pred_check
      _
    $region27: #{tpu_custom_call.1} parent=1 // pred_check_branch
      %329 = sbr.rel (0) target = $region29
    $region28: #{tpu_custom_call.1} parent=1 // pred_region
      %330 = dma.done [#allocation4], 16
    $region29: #{tpu_custom_call.1} parent=1 // pred_fallthru
      _
    %331 = vsyncpa [#allocation4], 1

</llo_original>
